<compile_context>
chip_gen: v7x
topology: tpu7x:2x2x1
jax: 0.10.0
libtpu: 0.0.40
codegen_flags: <defaults>
</compile_context>

<pallas_src>
import math

import numpy as np
import jax
import jax.numpy as jnp
from jax.experimental import pallas as pl
from jax.experimental.pallas import tpu as pltpu


def _sinusoidal_kernel(x_ref, fp_ref, out_ref):
    # x_ref:   (TILE_N, 1)  float32 in VMEM
    # fp_ref:  (2, dim)     float32 in VMEM; row 0 = freqs_full, row 1 = phase
    # out_ref: (TILE_N, dim) out dtype in VMEM
    x = x_ref[...]              # (TILE_N, 1)
    freqs = fp_ref[0:1, :]      # (1, dim)
    phase = fp_ref[1:2, :]      # (1, dim)
    # cos(z) = sin(z + pi/2): one full-width, unmasked, lane-dense store.
    out_ref[...] = jnp.sin(x * freqs + phase).astype(out_ref.dtype)


def _round_up8(v: int) -> int:
    return ((v + 7) // 8) * 8


def sinusoidal_pos_emb(
    x: jax.Array,
    dim: int,
    theta: float = 10000.0,
    *,
    tile_n: int = 1024,
    out_dtype=None,
) -> jax.Array:
    """Pallas equivalent of SinusoidalPosEmb(dim, theta).forward(x), float path.

    x: shape [N], floating dtype.  Returns [N, dim] in `out_dtype`
    (default: x.dtype, matching the torch module's `.type(dtype)`).
    """
    assert x.ndim == 1, "input to sinusoidal pos emb must be a 1-D float vector"
    assert jnp.issubdtype(x.dtype, jnp.floating), (
        "only the float input path is implemented (torch.long path is not)"
    )
    assert dim % 2 == 0 and dim >= 4, "dim must be even and >= 4"

    n = x.shape[0]
    half = dim // 2
    if out_dtype is None:
        out_dtype = x.dtype

    # Trace-time constants (no in-kernel exp / iota / concat).
    freqs_half = np.exp(
        np.arange(half, dtype=np.float32) * (-math.log(theta) / float(half - 1))
    )
    freqs_full = np.concatenate([freqs_half, freqs_half]).astype(np.float32)
    phase = np.concatenate(
        [np.zeros(half, np.float32), np.full(half, math.pi / 2.0, np.float32)]
    )
    fp = jnp.asarray(np.stack([freqs_full, phase], axis=0))  # (2, dim) f32

    # --- choose N-tile: multiple of 8, working set under v7x VMEM headroom. ---
    # out tile double-buffered (x2); (tile_n, 1) f32 x tile is lane-padded in
    # VMEM (~512 B/row) and also double-buffered.  fp is negligible.
    out_bytes_per_row = dim * jnp.dtype(out_dtype).itemsize
    bytes_per_row = 2 * out_bytes_per_row + 2 * 512
    max_rows = max(8, ((24 * 1024 * 1024) // bytes_per_row) // 8 * 8)
    tile_n = max(8, (min(tile_n, _round_up8(n), max_rows) // 8) * 8)
    # Megacore (v7x): ensure >= 2 grid steps when n allows so both TCs get work.
    if n >= 16:
        split_cap = max(8, _round_up8(pl.cdiv(n, 2)))
        tile_n = min(tile_n, split_cap)

    grid = (pl.cdiv(n, tile_n),)  # ragged last block: no pad, no out[:n] copy
    x2d = x.astype(jnp.float32).reshape(n, 1)

    return pl.pallas_call(
        _sinusoidal_kernel,
        out_shape=jax.ShapeDtypeStruct((n, dim), out_dtype),
        grid=grid,
        in_specs=[
            pl.BlockSpec((tile_n, 1), lambda i: (i, 0)),
            pl.BlockSpec((2, dim), lambda i: (0, 0)),
        ],
        out_specs=pl.BlockSpec((tile_n, dim), lambda i: (i, 0)),
        compiler_params=pltpu.CompilerParams(
            dimension_semantics=("parallel",),
            vmem_limit_bytes=32 * 1024 * 1024,
        ),
    )(x2d, fp)


def _reference(x: jax.Array, dim: int, theta: float = 10000.0) -> jax.Array:
    half = dim // 2
    emb = math.log(theta) / (half - 1)
    freqs = jnp.exp(jnp.arange(half, dtype=jnp.float32) * -emb)
    args = x[:, None].astype(jnp.float32) * freqs[None, :]
    return jnp.concatenate([jnp.sin(args), jnp.cos(args)], axis=-1).astype(x.dtype)


if __name__ == "__main__":
    key = jax.random.PRNGKey(0)
    k1, k2 = jax.random.split(key)

    # Test 1: tiny shape matching the module's typical use (8 timesteps, dim 32).
    N, DIM = 8, 32
    x = jax.random.uniform(k1, (N,), dtype=jnp.float32, minval=0.0, maxval=100.0)
    out = jax.block_until_ready(sinusoidal_pos_emb(x, DIM, theta=10000.0))
    ref = _reference(x, DIM, theta=10000.0)
    assert out.shape == (N, DIM), out.shape
    assert out.dtype == jnp.float32
    assert jnp.allclose(out, ref, atol=5e-4, rtol=5e-4), "mismatch vs reference (small)"

    # Test 2: ragged multi-tile grid (N not a multiple of tile_n, grid > 1).
    N2, DIM2 = 300, 128
    x2 = jax.random.uniform(k2, (N2,), dtype=jnp.float32, minval=0.0, maxval=100.0)
    out2 = jax.block_until_ready(sinusoidal_pos_emb(x2, DIM2, theta=10000.0, tile_n=64))
    ref2 = _reference(x2, DIM2, theta=10000.0)
    assert out2.shape == (N2, DIM2), out2.shape
    assert jnp.allclose(out2, ref2, atol=5e-4, rtol=5e-4), "mismatch vs reference (ragged)"

    # Test 3: bf16 output option (halves HBM writeback for bf16 consumers).
    out3 = jax.block_until_ready(
        sinusoidal_pos_emb(x2, DIM2, theta=10000.0, tile_n=64, out_dtype=jnp.bfloat16)
    )
    assert out3.dtype == jnp.bfloat16 and out3.shape == (N2, DIM2)
    assert jnp.allclose(out3.astype(jnp.float32), ref2, atol=2e-2, rtol=2e-2), (
        "mismatch vs reference (bf16)"
    )

    print("KERNEL_OK")
</pallas_src>

<mosaic_0001>
module attributes {stable_mosaic.version = 11 : i64} {
  func.func @_sinusoidal_kernel(%arg0: i32, %arg1: memref<8x1xf32, #tpu.memory_space<vmem>>, %arg2: memref<2x32xf32, #tpu.memory_space<vmem>>, %arg3: memref<8x32xf32, #tpu.memory_space<vmem>>) attributes {dimension_semantics = [#tpu.dimension_semantics<parallel>], iteration_bounds = array<i64: 1>, scalar_prefetch = 0 : i64, scratch_operands = 0 : i64, tpu.core_type = #tpu.core_type<tc>, window_params = [{transform_indices = @transform_0, window_bounds = array<i64: 8, 1>}, {pipeline_mode = #tpu.pipeline_mode<synchronous>, transform_indices = @transform_1, window_bounds = array<i64: 2, 32>}, {transform_indices = @transform_2, window_bounds = array<i64: 8, 32>}]} {
    %c0 = arith.constant 0 : index
    %c0_0 = arith.constant 0 : index
    %0 = vector.load %arg1[%c0, %c0_0] : memref<8x1xf32, #tpu.memory_space<vmem>>, vector<8x1xf32>
    %c0_1 = arith.constant 0 : index
    %c0_2 = arith.constant 0 : index
    %1 = vector.load %arg2[%c0_1, %c0_2] : memref<2x32xf32, #tpu.memory_space<vmem>>, vector<1x32xf32>
    %c1 = arith.constant 1 : index
    %c0_3 = arith.constant 0 : index
    %2 = vector.load %arg2[%c1, %c0_3] : memref<2x32xf32, #tpu.memory_space<vmem>>, vector<1x32xf32>
    %3 = vector.broadcast %0 : vector<8x1xf32> to vector<8x32xf32>
    %4 = vector.broadcast %1 : vector<1x32xf32> to vector<8x32xf32>
    %5 = arith.mulf %3, %4 : vector<8x32xf32>
    %6 = vector.broadcast %2 : vector<1x32xf32> to vector<8x32xf32>
    %7 = arith.addf %5, %6 : vector<8x32xf32>
    %8 = math.sin %7 : vector<8x32xf32>
    %c0_4 = arith.constant 0 : index
    %c0_5 = arith.constant 0 : index
    %9 = vector.load %arg3[%c0_4, %c0_5] : memref<8x32xf32, #tpu.memory_space<vmem>>, vector<8x32xf32>
    tpu.vector_store %arg3[%c0_4, %c0_5], %8 {strides = array<i32>} : memref<8x32xf32, #tpu.memory_space<vmem>>, vector<8x32xf32>,
    return
  }
  func.func @transform_0(%arg0: i32) -> (i32, i32) {
    %c0_i32 = arith.constant 0 : i32
    %c0_i32_0 = arith.constant 0 : i32
    return %arg0, %c0_i32 : i32, i32
  }
  func.func @transform_1(%arg0: i32) -> (i32, i32) {
    %c0_i32 = arith.constant 0 : i32
    %c0_i32_0 = arith.constant 0 : i32
    %c0_i32_1 = arith.constant 0 : i32
    return %c0_i32, %c0_i32_0 : i32, i32
  }
  func.func @transform_2(%arg0: i32) -> (i32, i32) {
    %c0_i32 = arith.constant 0 : i32
    %c0_i32_0 = arith.constant 0 : i32
    return %arg0, %c0_i32 : i32, i32
  }
}

</mosaic_0001>

<llo_original>
// kernel: tpu_custom_call.1
$region0: #{tpu_custom_call.1}
  #allocation0 [shape = 'u32[]', space=smem, size = 0x4, offset = 0x4, fixed_abs, tag = 'smem constant byte address 0x4 - core index']
  #allocation1 [shape = 'u32[144,128]{1,0:T(1,128)}', space=vmem, size = 0x12000, scoped, tag = 'internal scratch']
  %s0 = inlined_call_operand.vmem [shape: f32[8,1], index: 0, kind: input, shape index: {}]
  %s1 = inlined_call_operand.vmem [shape: f32[2,32], index: 1, kind: input, shape index: {}]
  %s2 = inlined_call_operand.hbm [shape: f32[8,32], index: 2, kind: output, shape index: {}]
  %s3 = sld [smem:[#allocation0]]
  $region18: #{tpu_custom_call.1} parent=0
    _
  %s5 = ssub.s32 1, %s3
  %s6 = scalar_select 0, %s5, %s3
  $region1: #{tpu_custom_call.1} parent=0
    #allocation2 [shape = 'u8[4096]{0}', space=vmem, size = 0x1000, scoped, tag = 'output window, operand 0, single buffered']
    #allocation3 [shape = 's32[1]{0}', space=sflag, size = 0x4, scoped, tag = 'scoped memory for tpu_custom_call.1']
    %7 = vsyncpa [#allocation3], 0
    // Predicated region
    $region2: #{tpu_custom_call.1} parent=1 // pred_check
      _
    $region3: #{tpu_custom_call.1} parent=1 // pred_check_branch
      %9 = sbr.rel (0) target = $region5
    $region4: #{tpu_custom_call.1} parent=1 // pred_region
      _
    $region5: #{tpu_custom_call.1} parent=1 // pred_fallthru
      _
    // Predicated region
    $region6: #{tpu_custom_call.1} parent=1 // pred_check
      _
    $region7: #{tpu_custom_call.1} parent=1 // pred_check_branch
      %11 = sbr.rel (0) target = $region9
    $region8: #{tpu_custom_call.1} parent=1 // pred_region
      _
    $region9: #{tpu_custom_call.1} parent=1 // pred_fallthru
      _
    %v12 = vld [vmem:[%s0] sm:$0xff]
    %v13 = vld [vmem:[%s1] sm:$0x1]
    %v14 = vld [vmem:[%s1 + $0x1] sm:$0x1]
    %16 = vset.pattern.permute.xlu0 0
    %17 = vperm.xlu0 %16, %v12
    %v18 = vpop.permute.xlu0 %17
    %v20 = vlaneseq
    %v21 = vshrl.u32 %v20, 7
    %v22 = vsub.s32 0, %v21
    %v23 = vrot.slane %v13, %v22
    %v24 = vmul.f32 %v18, %v23
    %v25 = vlaneseq
    %v26 = vshrl.u32 %v25, 7
    %v27 = vsub.s32 0, %v26
    %v28 = vrot.slane %v14, %v27
    %v29 = vadd.f32 %v24, %v28
    %v30 = vand.u32 2147483647, %v29
    %vm31 = vcmp.le.f32.partialorder %v30, 0.7853982
    %vm32 = vcmp.lt.s32.totalorder %v29, 0
    %v33 = vand.u32 %v29, 2139095040
    %v34 = vshrl.u32 %v33, 23
    %v35 = vsub.s32 %v34, 127
    %v36 = vand.u32 2147483647, %v29
    %v37 = vand.u32 %v36, 8388607
    %v38 = vor.u32 %v37, 8388608
    %v39 = vsub.s32 0, %v38
    %v40 = vadd.s32 %v35, 1
    %vm41 = vcmp.gt.s32.totalorder %v40, 0
    %v42 = vsel %vm41, %v40, 0
    %v43 = vshrl.u32 %v42, 5
    %v44 = vand.u32 %v42, 31
    %v45 = vsub.s32 32, %v44
    %v46 = vshrl.u32 683565275, %v45
    %v47 = vshll.u32 683565275, %v44
    %v48 = vshrl.u32 2475754826, %v45
    %v49 = vor.u32 %v47, %v48
    %v50 = vshll.u32 2475754826, %v44
    %v51 = vshrl.u32 2131351028, %v45
    %v52 = vor.u32 %v50, %v51
    %v53 = vshll.u32 2131351028, %v44
    %v54 = vshrl.u32 2102212464, %v45
    %v55 = vor.u32 %v53, %v54
    %v56 = vshll.u32 2102212464, %v44
    %v57 = vshrl.u32 920167782, %v45
    %v58 = vor.u32 %v56, %v57
    %v59 = vshll.u32 920167782, %v44
    %v60 = vshrl.u32 1326507024, %v45
    %v61 = vor.u32 %v59, %v60
    %vm62 = vcmp.lt.s32.totalorder %v43, 1
    %vm63 = vcmp.lt.s32.totalorder %v43, 2
    %vm64 = vcmp.lt.s32.totalorder %v43, 3
    %vm65 = vcmp.lt.s32.totalorder %v43, 4
    %v66 = vsel %vm62, %v46, %v49
    %v67 = vsel %vm65, %v55, 2102212464
    %v68 = vsel %vm64, %v52, %v67
    %v69 = vsel %vm63, %v66, %v68
    %v70 = vsel %vm62, %v49, %v52
    %v71 = vsel %vm65, %v58, 920167782
    %v72 = vsel %vm64, %v55, %v71
    %v73 = vsel %vm63, %v70, %v72
    %v74 = vsel %vm62, %v52, %v55
    %v75 = vsel %vm65, %v61, 1326507024
    %v76 = vsel %vm64, %v58, %v75
    %v77 = vsel %vm63, %v74, %v76
    %v78 = vshll.u32 %v38, 8
    %v79 = vmul.u32.u64.compose %v78, %v77
    %v80 = vextract.low.u32 %v79
    %v81 = vextract.high.u32 %v79
    %v82 = vmul.u32.u64.compose %v78, %v73
    %v83 = vextract.low.u32 %v82
    %v84 = vextract.high.u32 %v82
    %v85 = vmul.u32 %v78, %v69
    %v86 = vadd.s32 %v81, %v83
    %vm87 = vc.u32 %v81, %v83
    %v88 = vadd.s32 %v84, 1
    %v89 = vsel %vm87, %v88, %v84
    %v90 = vadd.s32 %v85, %v89
    %v91 = vadd.s32 %v90, 536870912
    %v92 = vshrl.u32 %v91, 30
    %v93 = vshll.u32 %v92, 30
    %v94 = vsub.s32 %v90, %v93
    %vm95 = vcmp.lt.s32.totalorder %v94, 0
    %v96 = vsub.s32 0, %v94
    %v97 = vsel %vm95, %v96, %v94
    %v98 = vclz %v97
    %v99 = vsub.s32 %v98, 2
    %vm100 = vcmp.gt.s32.totalorder 0, %v99
    %v101 = vsel %vm100, 0, %v99
    %v102 = vsub.s32 32, %v101
    %v103 = vshll.u32 %v94, %v101
    %v104 = vshrl.u32 %v86, %v102
    %v105 = vor.u32 %v103, %v104
    %v106 = vsub.s32 4294967266, %v101
    %v107 = vadd.s32 %v106, 127
    %v108 = vshll.u32 %v107, 23
    %v109 = vor.u32 4788187, %v108
    %v110 = vand.u32 2147483647, %v109
    %v112 = vcvt.s32.f32 %v105
    %v113 = vmul.f32 %v112, %v110
    %v114 = vxor.u32 %v113, 2147483648
    %v115 = vsel %vm32, %v114, %v113
    %v116 = vsub.s32 4, %v92
    %v117 = vsel %vm32, %v116, %v92
    %v118 = vsel %vm31, %v29, %v115
    %v119 = vsel %vm31, 0, %v117
    %v120 = vcosq.f32.pop %v118
    %v121 = vsinq.f32.pop %v118
    %vm122 = vweird.f32 %v29
    %v123 = vadd.s32 %v119, 3
    %v124 = vand.u32 %v123, 3
    %vm125 = vcmp.lt.s32.totalorder %v124, 2
    %vm126 = vcmp.eq.s32.totalorder %v124, 0
    %v127 = vxor.u32 %v121, 2147483648
    %v128 = vsel %vm126, %v120, %v127
    %vm129 = vcmp.eq.s32.totalorder %v124, 2
    %v130 = vxor.u32 %v120, 2147483648
    %v131 = vsel %vm129, %v130, %v121
    %v132 = vsel %vm125, %v128, %v131
    %v133 = vsel %vm122, nan, %v132
    %vm134 = vcmask 261120
    %135 = vst.msk [vmem:[#allocation2] sm:$0xff] %vm134, %v133
    // Predicated region
    $region10: #{tpu_custom_call.1} parent=1 // pred_check
      _
    $region11: #{tpu_custom_call.1} parent=1 // pred_check_branch
      %137 = sbr.rel (0) target = $region13
    $region12: #{tpu_custom_call.1} parent=1 // pred_region
      %s139 = ssub.s32 128, 128
      %140 = vsyncadd [#allocation3], %s139
      %s142 = sshll.u32 [#allocation2], 4
      %s143 = int_to_ptr.vmem [resolvable:$true] %s142
      %145 = dma.vmem_to_hbm [thread:$0]  %s143, 128, %s2, [#allocation3]
    $region13: #{tpu_custom_call.1} parent=1 // pred_fallthru
      _
    // Predicated region
    $region14: #{tpu_custom_call.1} parent=1 // pred_check
      _
    $region15: #{tpu_custom_call.1} parent=1 // pred_check_branch
      %147 = sbr.rel (0) target = $region17
    $region16: #{tpu_custom_call.1} parent=1 // pred_region
      %148 = dma.done [#allocation3], 128
    $region17: #{tpu_custom_call.1} parent=1 // pred_fallthru
      _
    %149 = vsyncpa [#allocation3], 1

</llo_original>
